<compile_context>
chip_gen: v7x
topology: tpu7x:2x2x1
jax: 0.10.0
libtpu: 0.0.40
codegen_flags: <defaults>
</compile_context>

<pallas_src>
import functools
import math

import jax
import jax.numpy as jnp
from jax import lax
from jax.experimental import pallas as pl
from jax.experimental.pallas import tpu as pltpu

_LANES = 128

# Squeezed-dim sentinel for BlockSpec (None is the long-standing equivalent).
_SQUEEZED = pl.Squeezed() if hasattr(pl, "Squeezed") else None


def _round_up(x, m):
    return (x + m - 1) // m * m


def _dispatch_accumulate(accumulate, g, blocks_total, has_tail, has_overrun):
    """Guard the per-step accumulate so the lane-tail mask only exists on the last
    real feature block and overrun steps of the parallel chunk axis are skipped;
    the steady-state step stays strictly load + VALU."""
    if has_tail:
        # has_tail implies blocks_total >= 2.  Overrun steps (g >= blocks_total)
        # satisfy neither predicate and are skipped entirely.
        @pl.when(g < blocks_total - 1)
        def _():
            accumulate(masked=False)

        @pl.when(g == blocks_total - 1)
        def _():
            accumulate(masked=True)
    elif has_overrun:
        @pl.when(g < blocks_total)
        def _():
            accumulate(masked=False)
    else:
        accumulate(masked=False)


def _rmse_sums_kernel(gt_ref, pred_ref, out_sq_ref, acc_sq_ref, *,
                      blocks_total, blocks_per_chunk, tile_n, n_valid,
                      has_tail, has_overrun):
    """Per-sample sum((gt - pred)^2) over one chunk of the feature axis.

    Grid = (chunk, k).  Input blocks are (B, tile_n) slices of the flat (B, N)
    arrays (no wrapper pad/reshape copies).  Each chunk writes its per-sample
    partial sums (broadcast across 128 lanes) to its own (B, 128) output slab;
    the wrapper combines chunks, divides by N, takes sqrt and means over batch.
    """
    c = pl.program_id(0)
    k = pl.program_id(1)
    g = c * blocks_per_chunk + k                    # global feature-block index

    @pl.when(k == 0)
    def _():
        acc_sq_ref[...] = jnp.zeros_like(acc_sq_ref)

    def accumulate(masked):
        gt = gt_ref[...].astype(jnp.float32)        # stream HBM dtype, upcast in-kernel
        pr = pred_ref[...].astype(jnp.float32)
        d = gt - pr
        sq = d * d
        if masked:                                  # static: last real block only
            col = g * tile_n + lax.broadcasted_iota(jnp.int32, sq.shape, 1)
            # Select (not multiply) so garbage in OOB columns cannot leak NaN/Inf.
            sq = jnp.where(col < n_valid, sq, 0.0)
        acc_sq_ref[...] += jnp.sum(sq, axis=1, keepdims=True)   # lane-broadcast add

    _dispatch_accumulate(accumulate, g, blocks_total, has_tail, has_overrun)

    @pl.when(k == pl.num_programs(1) - 1)
    def _():
        out_sq_ref[...] = acc_sq_ref[...]


def _rmse_weighted_sums_kernel(gt_ref, pred_ref, w_ref, out_sq_ref, out_w_ref,
                               acc_sq_ref, acc_w_ref, *,
                               blocks_total, blocks_per_chunk, tile_n, n_valid,
                               has_tail, has_overrun):
    """Per-sample sum((gt - pred)^2 * w) and sum(w) over one chunk of the feature axis."""
    c = pl.program_id(0)
    k = pl.program_id(1)
    g = c * blocks_per_chunk + k

    @pl.when(k == 0)
    def _():
        acc_sq_ref[...] = jnp.zeros_like(acc_sq_ref)
        acc_w_ref[...] = jnp.zeros_like(acc_w_ref)

    def accumulate(masked):
        gt = gt_ref[...].astype(jnp.float32)
        pr = pred_ref[...].astype(jnp.float32)
        w = w_ref[...].astype(jnp.float32)
        d = gt - pr
        sq = d * d * w
        if masked:
            col = g * tile_n + lax.broadcasted_iota(jnp.int32, gt.shape, 1)
            valid = col < n_valid
            sq = jnp.where(valid, sq, 0.0)          # zero BEFORE accumulation
            w = jnp.where(valid, w, 0.0)
        acc_sq_ref[...] += jnp.sum(sq, axis=1, keepdims=True)
        acc_w_ref[...] += jnp.sum(w, axis=1, keepdims=True)

    _dispatch_accumulate(accumulate, g, blocks_total, has_tail, has_overrun)

    @pl.when(k == pl.num_programs(1) - 1)
    def _():
        out_sq_ref[...] = acc_sq_ref[...]
        out_w_ref[...] = acc_w_ref[...]


def rmse(gt, pred, weights=None, mask=None, *,
         input_buffer_budget_bytes=8 * 1024 * 1024,   # double-buffered input blocks
         vmem_limit_bytes=48 * 1024 * 1024):          # fits v7x 64 MiB VMEM w/ headroom
    """Pallas RMSE matching PyTorch RMSE.forward (mask path not supported)."""
    if mask is not None:
        # TODO(synk): boolean fancy-indexing produces a data-dependent shape;
        # no clean Pallas equivalent, so the mask path is not implemented.
        raise NotImplementedError("mask path is not supported")
    assert gt.shape == pred.shape
    if weights is not None:
        assert weights.shape == gt.shape

    B = gt.shape[0]
    N = math.prod(gt.shape[1:]) if gt.ndim > 1 else 1

    inputs = [gt.reshape(B, N), pred.reshape(B, N)]
    if weights is not None:
        inputs.append(weights.reshape(B, N))

    # Budget-driven feature tile.  VMEM footprint of a (B, tile_n) block pads the
    # sublane dim to a multiple of 8, so account for round_up(B, 8) rows.
    sublane_rows = _round_up(B, 8)
    bytes_per_col = sum(sublane_rows * x.dtype.itemsize for x in inputs)
    tile_n = input_buffer_budget_bytes // (2 * bytes_per_col)
    tile_n = max(_LANES, (tile_n // _LANES) * _LANES)

    if tile_n >= N:
        # Whole feature dim fits in one block: block dim == full array dim
        # satisfies the (8, 128) rule even for awkward N; no tail masking at all.
        tile_n = N
        blocks_total = 1
    else:
        blocks_total = pl.cdiv(N, tile_n)

    # Split the reduction into 2 megacore-parallel chunks (both v7x TCs even for B=1).
    num_chunks = 2 if blocks_total >= 2 else 1
    blocks_per_chunk = pl.cdiv(blocks_total, num_chunks)
    has_overrun = num_chunks * blocks_per_chunk != blocks_total
    has_tail = (N % tile_n) != 0
    grid = (num_chunks, blocks_per_chunk)

    if has_overrun:
        def feat_block(c, k):
            return (0, jnp.minimum(c * blocks_per_chunk + k, blocks_total - 1))
    else:
        def feat_block(c, k):
            return (0, c * blocks_per_chunk + k)

    in_spec = pl.BlockSpec((B, tile_n), feat_block)
    # Per-chunk, per-sample partial sums: lane-dense (B, 128) slab, written once
    # per chunk at finalize; the tiny combine runs in the wrapper.
    out_spec = pl.BlockSpec((_SQUEEZED, B, _LANES), lambda c, k: (c, 0, 0))
    out_struct = jax.ShapeDtypeStruct((num_chunks, B, _LANES), jnp.float32)
    out_bytes = num_chunks * B * _LANES * 4
    in_bytes = sum(x.size * x.dtype.itemsize for x in inputs)

    static_kwargs = dict(blocks_total=blocks_total, blocks_per_chunk=blocks_per_chunk,
                         tile_n=tile_n, n_valid=N, has_tail=has_tail,
                         has_overrun=has_overrun)
    compiler_params = pltpu.CompilerParams(
        dimension_semantics=("parallel", "arbitrary"),
        vmem_limit_bytes=vmem_limit_bytes,
    )

    if weights is None:
        sums_sq = pl.pallas_call(
            functools.partial(_rmse_sums_kernel, **static_kwargs),
            out_shape=out_struct,
            grid_spec=pltpu.PrefetchScalarGridSpec(
                num_scalar_prefetch=0,
                grid=grid,
                in_specs=[in_spec, in_spec],
                out_specs=out_spec,
                scratch_shapes=[pltpu.VMEM((B, _LANES), jnp.float32)],
            ),
            compiler_params=compiler_params,
            cost_estimate=pl.CostEstimate(flops=3 * B * N, transcendentals=0,
                                          bytes_accessed=in_bytes + out_bytes),
        )(*inputs)
        per_sample_sq = jnp.sum(sums_sq[:, :, 0], axis=0)            # (B,)
        return jnp.mean(jnp.sqrt(per_sample_sq / jnp.float32(N)))

    sums_sq, sums_w = pl.pallas_call(
        functools.partial(_rmse_weighted_sums_kernel, **static_kwargs),
        out_shape=(out_struct, out_struct),
        grid_spec=pltpu.PrefetchScalarGridSpec(
            num_scalar_prefetch=0,
            grid=grid,
            in_specs=[in_spec, in_spec, in_spec],
            out_specs=[out_spec, out_spec],
            scratch_shapes=[pltpu.VMEM((B, _LANES), jnp.float32),
                            pltpu.VMEM((B, _LANES), jnp.float32)],
        ),
        compiler_params=compiler_params,
        cost_estimate=pl.CostEstimate(flops=6 * B * N, transcendentals=0,
                                      bytes_accessed=in_bytes + 2 * out_bytes),
    )(*inputs)
    per_sample_sq = jnp.sum(sums_sq[:, :, 0], axis=0)
    per_sample_w = jnp.sum(sums_w[:, :, 0], axis=0)
    # NOTE: sum(weights) == 0 for a sample yields NaN, matching PyTorch.
    return jnp.mean(jnp.sqrt(per_sample_sq / per_sample_w))


def _rmse_ref(gt, pred, weights=None):
    """Pure-JAX reference mirroring the PyTorch module."""
    axes = tuple(range(1, gt.ndim))
    diff_sq = (gt - pred) ** 2
    if weights is None:
        return jnp.mean(jnp.sqrt(jnp.mean(diff_sq, axis=axes)))
    diff_sq = diff_sq * weights
    return jnp.mean(jnp.sqrt(jnp.sum(diff_sq, axis=axes) / jnp.sum(weights, axis=axes)))


if __name__ == "__main__":
    key = jax.random.PRNGKey(0)
    keys = jax.random.split(key, 9)

    def check(gt, pred, w=None, **kw):
        out = jax.block_until_ready(rmse(gt, pred, w, **kw))
        ref = _rmse_ref(gt, pred, w)
        assert jnp.allclose(out, ref, rtol=1e-5, atol=1e-5), (out, ref)

    # Main shape from the module context: B=2, C=4, H=W=16 (N = 1024).
    B, C, H, W = 2, 4, 16, 16
    gt = jax.random.normal(keys[0], (B, C, H, W), dtype=jnp.float32)
    pred = jax.random.normal(keys[1], (B, C, H, W), dtype=jnp.float32)
    weights = jax.random.uniform(keys[2], (B, C, H, W), dtype=jnp.float32) + 0.1
    check(gt, pred)
    check(gt, pred, weights)

    # Awkward feature size (N = 189): single full-width block, no pad, no mask.
    gt_o = jax.random.normal(keys[3], (2, 3, 7, 9), dtype=jnp.float32)
    pred_o = jax.random.normal(keys[4], (2, 3, 7, 9), dtype=jnp.float32)
    w_o = jax.random.uniform(keys[5], (2, 3, 7, 9), dtype=jnp.float32) + 0.1
    check(gt_o, pred_o)
    check(gt_o, pred_o, w_o)

    # Force multi-block tiling via a tiny budget to exercise the chunked
    # (megacore) reduction, the lane-tail mask and the odd-block overrun paths
    # (N = 300 -> 3 blocks of 128 split over 2 chunks).
    gt_m = jax.random.normal(keys[6], (2, 3, 10, 10), dtype=jnp.float32)
    pred_m = jax.random.normal(keys[7], (2, 3, 10, 10), dtype=jnp.float32)
    w_m = jax.random.uniform(keys[8], (2, 3, 10, 10), dtype=jnp.float32) + 0.1
    check(gt_m, pred_m, input_buffer_budget_bytes=24576)
    check(gt_m, pred_m, w_m, input_buffer_budget_bytes=24576)

    print("KERNEL_OK")
</pallas_src>

<mosaic_0001>
module attributes {stable_mosaic.version = 11 : i64} {
  func.func @_rmse_sums_kernel(%arg0: i32, %arg1: i32, %arg2: memref<2x1024xf32, #tpu.memory_space<vmem>>, %arg3: memref<2x1024xf32, #tpu.memory_space<vmem>>, %arg4: memref<1x2x128xf32, #tpu.memory_space<vmem>>, %arg5: memref<2x128xf32, #tpu.memory_space<vmem>>) attributes {dimension_semantics = [#tpu.dimension_semantics<parallel>, #tpu.dimension_semantics<arbitrary>], iteration_bounds = array<i64: 1, 1>, scalar_prefetch = 0 : i64, scratch_operands = 1 : i64, tpu.core_type = #tpu.core_type<tc>, window_params = [{transform_indices = @transform_0, window_bounds = array<i64: 2, 1024>}, {transform_indices = @transform_1, window_bounds = array<i64: 2, 1024>}, {transform_indices = @transform_2, window_bounds = array<i64: 1, 2, 128>}]} {
    %c0_i32 = arith.constant 0 : i32
    %0 = arith.cmpi eq, %arg1, %c0_i32 : i32
    %1 = arith.extui %0 : i1 to i32
    %c0_i32_0 = arith.constant 0 : i32
    %2 = arith.cmpi ne, %1, %c0_i32_0 : i32
    scf.if %2 {
      %cst_10 = arith.constant 0.000000e+00 : f32
      %16 = vector.broadcast %cst_10 : f32 to vector<2x128xf32>
      %c0_11 = arith.constant 0 : index
      %c0_12 = arith.constant 0 : index
      %17 = vector.load %arg5[%c0_11, %c0_12] : memref<2x128xf32, #tpu.memory_space<vmem>>, vector<2x128xf32>
      tpu.vector_store %arg5[%c0_11, %c0_12], %16 {strides = array<i32>} : memref<2x128xf32, #tpu.memory_space<vmem>>, vector<2x128xf32>,
    } else {
    }
    %c0 = arith.constant 0 : index
    %c0_1 = arith.constant 0 : index
    %3 = vector.load %arg2[%c0, %c0_1] : memref<2x1024xf32, #tpu.memory_space<vmem>>, vector<2x1024xf32>
    %c0_2 = arith.constant 0 : index
    %c0_3 = arith.constant 0 : index
    %4 = vector.load %arg3[%c0_2, %c0_3] : memref<2x1024xf32, #tpu.memory_space<vmem>>, vector<2x1024xf32>
    %5 = arith.subf %3, %4 : vector<2x1024xf32>
    %6 = arith.mulf %5, %5 : vector<2x1024xf32>
    %c0_4 = arith.constant 0 : index
    %c0_5 = arith.constant 0 : index
    %7 = vector.load %arg5[%c0_4, %c0_5] : memref<2x128xf32, #tpu.memory_space<vmem>>, vector<2x128xf32>
    %cst = arith.constant dense<0.000000e+00> : vector<2xf32>
    %8 = vector.multi_reduction <add>, %6, %cst [1] : vector<2x1024xf32> to vector<2xf32>
    %9 = vector.shape_cast %8 : vector<2xf32> to vector<2x1xf32>
    %10 = vector.broadcast %9 : vector<2x1xf32> to vector<2x128xf32>
    %11 = arith.addf %7, %10 : vector<2x128xf32>
    %c0_6 = arith.constant 0 : index
    %c0_7 = arith.constant 0 : index
    %12 = vector.load %arg5[%c0_6, %c0_7] : memref<2x128xf32, #tpu.memory_space<vmem>>, vector<2x128xf32>
    tpu.vector_store %arg5[%c0_6, %c0_7], %11 {strides = array<i32>} : memref<2x128xf32, #tpu.memory_space<vmem>>, vector<2x128xf32>,
    %c0_i32_8 = arith.constant 0 : i32
    %13 = arith.cmpi eq, %arg1, %c0_i32_8 : i32
    %14 = arith.extui %13 : i1 to i32
    %c0_i32_9 = arith.constant 0 : i32
    %15 = arith.cmpi ne, %14, %c0_i32_9 : i32
    scf.if %15 {
      %c0_10 = arith.constant 0 : index
      %c0_11 = arith.constant 0 : index
      %16 = vector.load %arg5[%c0_10, %c0_11] : memref<2x128xf32, #tpu.memory_space<vmem>>, vector<2x128xf32>
      %c0_12 = arith.constant 0 : index
      %c0_13 = arith.constant 0 : index
      %c0_14 = arith.constant 0 : index
      %17 = vector.load %arg4[%c0_12, %c0_13, %c0_14] : memref<1x2x128xf32, #tpu.memory_space<vmem>>, vector<1x2x128xf32>
      %18 = vector.shape_cast %17 : vector<1x2x128xf32> to vector<2x128xf32>
      %19 = vector.shape_cast %16 : vector<2x128xf32> to vector<1x2x128xf32>
      tpu.vector_store %arg4[%c0_12, %c0_13, %c0_14], %19 {strides = array<i32>} : memref<1x2x128xf32, #tpu.memory_space<vmem>>, vector<1x2x128xf32>,
    } else {
    }
    return
  }
  func.func @transform_0(%arg0: i32, %arg1: i32) -> (i32, i32) {
    %c1_i32 = arith.constant 1 : i32
    %0 = arith.muli %arg0, %c1_i32 : i32
    %1 = arith.addi %0, %arg1 : i32
    %c0_i32 = arith.constant 0 : i32
    %c0_i32_0 = arith.constant 0 : i32
    return %c0_i32, %1 : i32, i32
  }
  func.func @transform_1(%arg0: i32, %arg1: i32) -> (i32, i32) {
    %c1_i32 = arith.constant 1 : i32
    %0 = arith.muli %arg0, %c1_i32 : i32
    %1 = arith.addi %0, %arg1 : i32
    %c0_i32 = arith.constant 0 : i32
    %c0_i32_0 = arith.constant 0 : i32
    return %c0_i32, %1 : i32, i32
  }
  func.func @transform_2(%arg0: i32, %arg1: i32) -> (i32, i32, i32) {
    %c0_i32 = arith.constant 0 : i32
    %c0_i32_0 = arith.constant 0 : i32
    %c0_i32_1 = arith.constant 0 : i32
    return %arg0, %c0_i32, %c0_i32_0 : i32, i32, i32
  }
}

</mosaic_0001>

<llo_original>
// kernel: tpu_custom_call.1
$region0: #{tpu_custom_call.1}
  #allocation0 [shape = 'u32[]', space=smem, size = 0x4, offset = 0x4, fixed_abs, tag = 'smem constant byte address 0x4 - core index']
  #allocation1 [shape = 'u32[144,128]{1,0:T(1,128)}', space=vmem, size = 0x12000, scoped, tag = 'internal scratch']
  #allocation2 [shape = 'f32[2,128]{1,0:T(2,128)}', space=vmem, size = 0x400, scoped, tag = 'scratch operand']
  %s0 = inlined_call_operand.hbm [shape: f32[2,1024], index: 0, kind: input, shape index: {}]
  %s1 = inlined_call_operand.hbm [shape: f32[2,1024], index: 1, kind: input, shape index: {}]
  %s2 = inlined_call_operand.hbm [shape: f32[1,2,128], index: 2, kind: output, shape index: {}]
  %s3 = sld [smem:[#allocation0]]
  $region34: #{tpu_custom_call.1} parent=0
    _
  %s5 = ssub.s32 1, %s3
  %s6 = scalar_select 0, %s5, %s3
  $region1: #{tpu_custom_call.1} parent=0
    #allocation3 [shape = 'u8[8192]{0}', space=vmem, size = 0x2000, scoped, tag = 'input window, operand 0, single buffered']
    #allocation4 [shape = 's32[1]{0}', space=sflag, size = 0x4, scoped, tag = 'scoped memory for tpu_custom_call.1']
    #allocation5 [shape = 's32[1]{0}', space=sflag, size = 0x4, scoped, tag = 'scoped memory for tpu_custom_call.1']
    #allocation6 [shape = 'u8[8192]{0}', space=vmem, size = 0x2000, scoped, tag = 'input window, operand 1, single buffered']
    #allocation7 [shape = 's32[1]{0}', space=sflag, size = 0x4, scoped, tag = 'scoped memory for tpu_custom_call.1']
    #allocation8 [shape = 'u8[1024]{0}', space=vmem, size = 0x400, scoped, tag = 'output window, operand 0, single buffered']
    %7 = vsyncpa [#allocation4], 0
    %8 = vsyncpa [#allocation7], 0
    %9 = vsyncpa [#allocation5], 0
    // Predicated region
    $region2: #{tpu_custom_call.1} parent=1 // pred_check
      _
    $region3: #{tpu_custom_call.1} parent=1 // pred_check_branch
      %11 = sbr.rel (0) target = $region5
    $region4: #{tpu_custom_call.1} parent=1 // pred_region
      %s12 = sadd.s32 0, 0
      %s13 = smul.u32 8, %s12
      %s15 = ssub.s32 256, 256
      %16 = vsyncadd [#allocation4], %s15
      %s17 = smul.addr %s13, 32
      %s18 = scalar_lea.hbm %s0, %s17
      %s20 = sshll.u32 [#allocation3], 4
      %s21 = int_to_ptr.vmem [resolvable:$true] %s20
      %23 = dma.hbm_to_vmem [thread:$0]  %s18, 256, %s21, [#allocation4]
    $region5: #{tpu_custom_call.1} parent=1 // pred_fallthru
      _
    // Predicated region
    $region6: #{tpu_custom_call.1} parent=1 // pred_check
      _
    $region7: #{tpu_custom_call.1} parent=1 // pred_check_branch
      %25 = sbr.rel (0) target = $region9
    $region8: #{tpu_custom_call.1} parent=1 // pred_region
      %s26 = sadd.s32 0, 0
      %s27 = smul.u32 8, %s26
      %s29 = ssub.s32 256, 256
      %30 = vsyncadd [#allocation7], %s29
      %s31 = smul.addr %s27, 32
      %s32 = scalar_lea.hbm %s1, %s31
      %s34 = sshll.u32 [#allocation6], 4
      %s35 = int_to_ptr.vmem [resolvable:$true] %s34
      %37 = dma.hbm_to_vmem [thread:$0]  %s32, 256, %s35, [#allocation7]
    $region9: #{tpu_custom_call.1} parent=1 // pred_fallthru
      _
    // Predicated region
    $region10: #{tpu_custom_call.1} parent=1 // pred_check
      _
    $region11: #{tpu_custom_call.1} parent=1 // pred_check_branch
      %39 = sbr.rel (0) target = $region13
    $region12: #{tpu_custom_call.1} parent=1 // pred_region
      %40 = dma.done [#allocation4], 256
    $region13: #{tpu_custom_call.1} parent=1 // pred_fallthru
      _
    // Predicated region
    $region14: #{tpu_custom_call.1} parent=1 // pred_check
      _
    $region15: #{tpu_custom_call.1} parent=1 // pred_check_branch
      %42 = sbr.rel (0) target = $region17
    $region16: #{tpu_custom_call.1} parent=1 // pred_region
      %43 = dma.done [#allocation7], 256
    $region17: #{tpu_custom_call.1} parent=1 // pred_fallthru
      _
    %s44 = sadd.s32 0, 0
    %s45 = smul.u32 8, %s44
    %s46 = sadd.s32 0, 0
    %s47 = smul.u32 8, %s46
    %p48 = scmp.eq.s32.totalorder 0, 0
    // Predicated region
    $region18: #{tpu_custom_call.1} parent=1 // pred_check
      %p49 = pneg %p48
    $region19: #{tpu_custom_call.1} parent=1 // pred_check_branch
      %51 = sbr.rel (%p49) target = $region21
    $region20: #{tpu_custom_call.1} parent=1 // pred_region
      %52 = vst [vmem:[#allocation2] sm:$0x3] 0.0
    $region21: #{tpu_custom_call.1} parent=1 // pred_fallthru
      _
    %v53 = vld [vmem:[#allocation3] sm:$0xff]
    %v54 = vld [vmem:[#allocation3 + $0x8] sm:$0xff]
    %v55 = vld [vmem:[#allocation6] sm:$0xff]
    %v56 = vld [vmem:[#allocation6 + $0x8] sm:$0xff]
    %v57 = vsub.f32 %v53, %v55
    %v58 = vsub.f32 %v54, %v56
    %v59 = vmul.f32 %v57, %v57
    %v60 = vmul.f32 %v58, %v58
    %v61 = vld [vmem:[#allocation2] sm:$0x3]
    %v64 = vcombine.high %v59, %v59
    %v66 = vunpack.c.l.s4 1983009808
    %v67 = vunpack.c.0.s8 %v66
    %v68 = vlaneseq
    %v69 = vshrl.u32 %v68, 7
    %v70 = vsub.s32 %v67, %v69
    %v71 = vrot.slane %v59, %v70
    %v73 = vunpack.c.l.s4 1983009808
    %v74 = vunpack.c.0.s8 %v73
    %v75 = vlaneseq
    %v76 = vshrl.u32 %v75, 7
    %v77 = vsub.s32 %v74, %v76
    %v78 = vrot.slane %v64, %v77
    %v79 = vcombine.high %v71, %v71
    %v80 = vcombine.high %v78, %v78
    %v81 = vcombine.high %v60, %v60
    %v83 = vunpack.c.l.s4 1983009808
    %v84 = vunpack.c.0.s8 %v83
    %v85 = vlaneseq
    %v86 = vshrl.u32 %v85, 7
    %v87 = vsub.s32 %v84, %v86
    %v88 = vrot.slane %v60, %v87
    %v90 = vunpack.c.l.s4 1983009808
    %v91 = vunpack.c.0.s8 %v90
    %v92 = vlaneseq
    %v93 = vshrl.u32 %v92, 7
    %v94 = vsub.s32 %v91, %v93
    %v95 = vrot.slane %v81, %v94
    %v96 = vcombine.high %v88, %v88
    %v97 = vcombine.high %v95, %v95
    %vm106 = vcmask 1041408
    %v107 = vsel %vm106, %v71, 0.0
    %v108 = vsel %vm106, %v79, 0.0
    %v109 = vadd.f32 %v107, %v108
    %v110 = vsel %vm106, %v78, 0.0
    %v111 = vadd.f32 %v109, %v110
    %v112 = vsel %vm106, %v80, 0.0
    %v113 = vadd.f32 %v111, %v112
    %v114 = vsel %vm106, %v88, 0.0
    %v115 = vadd.f32 %v113, %v114
    %v116 = vsel %vm106, %v96, 0.0
    %v117 = vadd.f32 %v115, %v116
    %v118 = vsel %vm106, %v95, 0.0
    %v119 = vadd.f32 %v117, %v118
    %v120 = vsel %vm106, %v97, 0.0
    %v121 = vadd.f32 %v119, %v120
    %122 = vadd.xlane.f32.xlu0 %v121
    %v123 = vpop.xlane.xlu0 %122
    %v124 = vadd.f32 %v61, %v123
    %125 = vst [vmem:[#allocation2] sm:$0x3] %v124
    // Predicated region
    $region22: #{tpu_custom_call.1} parent=1 // pred_check
      %p126 = pneg %p48
    $region23: #{tpu_custom_call.1} parent=1 // pred_check_branch
      %128 = sbr.rel (%p126) target = $region25
    $region24: #{tpu_custom_call.1} parent=1 // pred_region
      %v129 = vld [vmem:[#allocation2] sm:$0x3]
      %130 = vst [vmem:[#allocation8] sm:$0x3] %v129
    $region25: #{tpu_custom_call.1} parent=1 // pred_fallthru
      _
    // Predicated region
    $region26: #{tpu_custom_call.1} parent=1 // pred_check
      _
    $region27: #{tpu_custom_call.1} parent=1 // pred_check_branch
      %132 = sbr.rel (0) target = $region29
    $region28: #{tpu_custom_call.1} parent=1 // pred_region
      %s134 = ssub.s32 32, 32
      %135 = vsyncadd [#allocation5], %s134
      %s137 = sshll.u32 [#allocation8], 4
      %s138 = int_to_ptr.vmem [resolvable:$true] %s137
      %140 = dma.vmem_to_hbm [thread:$0]  %s138, 32, %s2, [#allocation5]
    $region29: #{tpu_custom_call.1} parent=1 // pred_fallthru
      _
    // Predicated region
    $region30: #{tpu_custom_call.1} parent=1 // pred_check
      _
    $region31: #{tpu_custom_call.1} parent=1 // pred_check_branch
      %142 = sbr.rel (0) target = $region33
    $region32: #{tpu_custom_call.1} parent=1 // pred_region
      %143 = dma.done [#allocation5], 32
    $region33: #{tpu_custom_call.1} parent=1 // pred_fallthru
      _
    %144 = vsyncpa [#allocation4], 1
    %145 = vsyncpa [#allocation7], 1
    %146 = vsyncpa [#allocation5], 1

</llo_original>
